<compile_context>
chip_gen: v6e
topology: v6e:2x2x1
jax: 0.10.0
libtpu: 0.0.40
codegen_flags: <defaults>
</compile_context>

<pallas_src>
import jax
import jax.numpy as jnp
from jax.experimental import pallas as pl
from jax.experimental.pallas import tpu as pltpu


def _round_up(x, m):
    return (x + m - 1) // m * m


def _mixing_kernel(coef_ref, h_ref, d_ref, g_ref, wt_ref, b_ref, o_ref):
    # coef_ref: SMEM (3,) f32 -> a1, a2, a3
    a1 = coef_ref[0]
    a2 = coef_ref[1]
    a3 = coef_ref[2]
    # weighted sum of the three streams (VPU, elementwise)
    z0 = a1 * h_ref[...] + a2 * d_ref[...] + a3 * g_ref[...]
    # y = z0 @ W.T; W.T was materialized once in the wrapper -> plain MXU matmul
    y = jnp.dot(z0, wt_ref[...], preferred_element_type=jnp.float32)
    o_ref[...] = (y + b_ref[...]).astype(o_ref.dtype)


def _vmem_info():
    """Generation-aware VMEM budget (v5e/v6e: 128 MiB, v7x: 64 MiB)."""
    try:
        cap = int(pltpu.get_tpu_info().vmem_capacity_bytes)
    except Exception:
        cap = 64 * 1024 * 1024          # conservative (v7x-sized) fallback
    budget = (cap * 45) // 100          # ~10-15% headroom below the limit for
    limit = (cap * 70) // 100           # Mosaic internal scratch / semaphores
    return budget, limit


def _tile_plan(M, D):
    budget, vmem_limit = _vmem_info()
    f32 = 4

    # >= 4 row steps so a 2-TensorCore part (v7x) gets >= 2 steps per core.
    tm_rows = _round_up(pl.cdiv(M, 4), 8)

    def tm_cap(tn):
        resident = 2 * (D * tn + tn) * f32       # double-buffered weight + bias
        per_row = 2 * (3 * D + tn) * f32         # double-buffered h/d/g/out rows
        avail = budget - resident
        return 0 if avail <= 0 else (avail // per_row) // 8 * 8

    want_tm = min(256, _round_up(M, 8))          # "big enough" row-tile target

    tn = D                                       # try fully-resident weight first
    if tm_cap(tn) < want_tm:
        # Weight too large to keep resident next to big row tiles:
        # N-tile the linear layer over the output columns instead.
        tn = 512
        while tn > 128 and tm_cap(tn) < want_tm:
            tn //= 2
        # TODO(synk): for truly huge D a K-tiled accumulator variant would also
        # avoid re-reading the activation rows once per column tile.

    tm = max(8, min(512, tm_rows, max(8, tm_cap(tn))))
    return tm, tn, vmem_limit


def mixing_layer(hidd_out, diff_out, gru_out, a1, a2, a3, weight, bias):
    """
    hidd_out, diff_out, gru_out : [B, L, D] float32
    a1, a2, a3                  : scalars (nn.Parameter values)
    weight                      : [D, D] (nn.Linear weight; y = x @ weight.T + b)
    bias                        : [D]
    returns                     : [B, L, D]
    """
    B, L, D = hidd_out.shape
    M = B * L

    tm, tn, vmem_limit = _tile_plan(M, D)
    nm = pl.cdiv(M, tm)                 # row tiles (ragged last block OK)
    nn_ = pl.cdiv(D, tn)                # output-column tiles (1 in common case)

    h2 = hidd_out.reshape(M, D)
    d2 = diff_out.reshape(M, D)
    g2 = gru_out.reshape(M, D)
    wt = jnp.transpose(weight)          # [D_in, D_out], once, outside the grid
    b2 = bias.reshape(1, D)
    coefs = jnp.asarray([a1, a2, a3], dtype=jnp.float32)

    # grid = (col tiles, row tiles): the weight column block is constant along
    # the inner row axis, so it is DMA'd once per column tile (once total when
    # nn_ == 1) and stays resident in VMEM.
    row_spec = pl.BlockSpec((tm, D), lambda j, i: (i, 0))

    out = pl.pallas_call(
        _mixing_kernel,
        out_shape=jax.ShapeDtypeStruct((M, D), hidd_out.dtype),
        grid=(nn_, nm),
        in_specs=[
            pl.BlockSpec(memory_space=pltpu.SMEM),          # coefs (3,)
            row_spec,                                       # hidd rows
            row_spec,                                       # diff rows
            row_spec,                                       # gru rows
            pl.BlockSpec((D, tn), lambda j, i: (0, j)),     # W.T column block
            pl.BlockSpec((1, tn), lambda j, i: (0, j)),     # bias block
        ],
        out_specs=pl.BlockSpec((tm, tn), lambda j, i: (i, j)),
        compiler_params=pltpu.CompilerParams(
            dimension_semantics=("parallel", "parallel"),
            vmem_limit_bytes=vmem_limit),
    )(coefs, h2, d2, g2, wt, b2)

    return out.reshape(B, L, D)


if __name__ == "__main__":
    key = jax.random.PRNGKey(0)
    B, L, D = 2, 8, 32     # batch, seq len, emb_dim

    k1, k2, k3, kw, kb = jax.random.split(key, 5)
    hidd_out = jax.random.normal(k1, (B, L, D), dtype=jnp.float32)
    diff_out = jax.random.normal(k2, (B, L, D), dtype=jnp.float32)
    gru_out = jax.random.normal(k3, (B, L, D), dtype=jnp.float32)

    # deterministic parameter init (matches module __init__ shapes)
    a1 = jnp.float32(0.33)
    a2 = jnp.float32(0.33)
    a3 = jnp.float32(0.33)
    bound = 1.0 / jnp.sqrt(D)
    weight = jax.random.uniform(kw, (D, D), jnp.float32, -bound, bound)
    bias = jax.random.uniform(kb, (D,), jnp.float32, -bound, bound)

    out = mixing_layer(hidd_out, diff_out, gru_out, a1, a2, a3, weight, bias)
    out = jax.block_until_ready(out)

    # pure-JAX reference (full-precision matmul for a fair f32 comparison)
    z0 = a1 * hidd_out + a2 * diff_out + a3 * gru_out
    ref = jnp.einsum("bld,ed->ble", z0, weight,
                     precision=jax.lax.Precision.HIGHEST) + bias

    assert out.shape == (B, L, D)
    assert jnp.allclose(out, ref, atol=1e-3, rtol=1e-3), "mismatch vs reference"

    print("KERNEL_OK")
</pallas_src>

<mosaic_0001>
module attributes {stable_mosaic.version = 11 : i64} {
  func.func @_mixing_kernel(%arg0: i32, %arg1: i32, %arg2: memref<3xf32, #tpu.memory_space<smem>>, %arg3: memref<8x32xf32, #tpu.memory_space<vmem>>, %arg4: memref<8x32xf32, #tpu.memory_space<vmem>>, %arg5: memref<8x32xf32, #tpu.memory_space<vmem>>, %arg6: memref<32x32xf32, #tpu.memory_space<vmem>>, %arg7: memref<1x32xf32, #tpu.memory_space<vmem>>, %arg8: memref<8x32xf32, #tpu.memory_space<vmem>>) attributes {dimension_semantics = [#tpu.dimension_semantics<parallel>, #tpu.dimension_semantics<parallel>], iteration_bounds = array<i64: 1, 2>, scalar_prefetch = 0 : i64, scratch_operands = 0 : i64, tpu.core_type = #tpu.core_type<tc>, window_params = [{transform_indices = @transform_0, window_bounds = array<i64: 3>}, {transform_indices = @transform_1, window_bounds = array<i64: 8, 32>}, {transform_indices = @transform_2, window_bounds = array<i64: 8, 32>}, {transform_indices = @transform_3, window_bounds = array<i64: 8, 32>}, {transform_indices = @transform_4, window_bounds = array<i64: 32, 32>}, {transform_indices = @transform_5, window_bounds = array<i64: 1, 32>}, {transform_indices = @transform_6, window_bounds = array<i64: 8, 32>}]} {
    %c0 = arith.constant 0 : index
    %0 = memref.load %arg2[%c0] : memref<3xf32, #tpu.memory_space<smem>>
    %c1 = arith.constant 1 : index
    %1 = memref.load %arg2[%c1] : memref<3xf32, #tpu.memory_space<smem>>
    %c2 = arith.constant 2 : index
    %2 = memref.load %arg2[%c2] : memref<3xf32, #tpu.memory_space<smem>>
    %c0_0 = arith.constant 0 : index
    %c0_1 = arith.constant 0 : index
    %3 = vector.load %arg3[%c0_0, %c0_1] : memref<8x32xf32, #tpu.memory_space<vmem>>, vector<8x32xf32>
    %4 = vector.broadcast %0 : f32 to vector<8x32xf32>
    %5 = arith.mulf %4, %3 : vector<8x32xf32>
    %c0_2 = arith.constant 0 : index
    %c0_3 = arith.constant 0 : index
    %6 = vector.load %arg4[%c0_2, %c0_3] : memref<8x32xf32, #tpu.memory_space<vmem>>, vector<8x32xf32>
    %7 = vector.broadcast %1 : f32 to vector<8x32xf32>
    %8 = arith.mulf %7, %6 : vector<8x32xf32>
    %9 = arith.addf %5, %8 : vector<8x32xf32>
    %c0_4 = arith.constant 0 : index
    %c0_5 = arith.constant 0 : index
    %10 = vector.load %arg5[%c0_4, %c0_5] : memref<8x32xf32, #tpu.memory_space<vmem>>, vector<8x32xf32>
    %11 = vector.broadcast %2 : f32 to vector<8x32xf32>
    %12 = arith.mulf %11, %10 : vector<8x32xf32>
    %13 = arith.addf %9, %12 : vector<8x32xf32>
    %c0_6 = arith.constant 0 : index
    %c0_7 = arith.constant 0 : index
    %14 = vector.load %arg6[%c0_6, %c0_7] : memref<32x32xf32, #tpu.memory_space<vmem>>, vector<32x32xf32>
    %cst = arith.constant dense<0.000000e+00> : vector<8x32xf32>
    %15 = tpu.matmul %13, %14, %cst {dimension_numbers = #tpu.dot_dimension_numbers<[1], [0], [0], [1], [0, 0, 1, 1], [], []>} : vector<8x32xf32>, vector<32x32xf32>, vector<8x32xf32> -> vector<8x32xf32>
    %c0_8 = arith.constant 0 : index
    %c0_9 = arith.constant 0 : index
    %16 = vector.load %arg7[%c0_8, %c0_9] : memref<1x32xf32, #tpu.memory_space<vmem>>, vector<1x32xf32>
    %17 = vector.broadcast %16 : vector<1x32xf32> to vector<8x32xf32>
    %18 = arith.addf %15, %17 : vector<8x32xf32>
    %c0_10 = arith.constant 0 : index
    %c0_11 = arith.constant 0 : index
    %19 = vector.load %arg8[%c0_10, %c0_11] : memref<8x32xf32, #tpu.memory_space<vmem>>, vector<8x32xf32>
    tpu.vector_store %arg8[%c0_10, %c0_11], %18 {strides = array<i32>} : memref<8x32xf32, #tpu.memory_space<vmem>>, vector<8x32xf32>,
    return
  }
  func.func @transform_0(%arg0: i32, %arg1: i32) -> i32 {
    %c0_i32 = arith.constant 0 : i32
    %c0_i32_0 = arith.constant 0 : i32
    return %c0_i32 : i32
  }
  func.func @transform_1(%arg0: i32, %arg1: i32) -> (i32, i32) {
    %c0_i32 = arith.constant 0 : i32
    %c0_i32_0 = arith.constant 0 : i32
    return %arg1, %c0_i32 : i32, i32
  }
  func.func @transform_2(%arg0: i32, %arg1: i32) -> (i32, i32) {
    %c0_i32 = arith.constant 0 : i32
    %c0_i32_0 = arith.constant 0 : i32
    return %arg1, %c0_i32 : i32, i32
  }
  func.func @transform_3(%arg0: i32, %arg1: i32) -> (i32, i32) {
    %c0_i32 = arith.constant 0 : i32
    %c0_i32_0 = arith.constant 0 : i32
    return %arg1, %c0_i32 : i32, i32
  }
  func.func @transform_4(%arg0: i32, %arg1: i32) -> (i32, i32) {
    %c0_i32 = arith.constant 0 : i32
    %c0_i32_0 = arith.constant 0 : i32
    return %c0_i32, %arg0 : i32, i32
  }
  func.func @transform_5(%arg0: i32, %arg1: i32) -> (i32, i32) {
    %c0_i32 = arith.constant 0 : i32
    %c0_i32_0 = arith.constant 0 : i32
    return %c0_i32, %arg0 : i32, i32
  }
  func.func @transform_6(%arg0: i32, %arg1: i32) -> (i32, i32) {
    %c0_i32 = arith.constant 0 : i32
    return %arg1, %arg0 : i32, i32
  }
}

</mosaic_0001>

<llo_original>
// kernel: tpu_custom_call.1
$region0: #{tpu_custom_call.1}
  #allocation0 [shape = 'u32[]', space=smem, size = 0x4, offset = 0x4, fixed_abs, tag = 'smem constant byte address 0x4 - core index']
  #allocation1 [shape = 'u32[144,128]{1,0:T(1,128)}', space=vmem, size = 0x12000, scoped, tag = 'internal scratch']
  %s0 = inlined_call_operand.hbm [shape: f32[3], index: 0, kind: input, shape index: {}]
  %s1 = inlined_call_operand.hbm [shape: f32[16,32], index: 1, kind: input, shape index: {}]
  %s2 = inlined_call_operand.hbm [shape: f32[16,32], index: 2, kind: input, shape index: {}]
  %s3 = inlined_call_operand.hbm [shape: f32[16,32], index: 3, kind: input, shape index: {}]
  %s4 = inlined_call_operand.hbm [shape: f32[32,32], index: 4, kind: input, shape index: {}]
  %s5 = inlined_call_operand.vmem [shape: f32[1,32], index: 5, kind: input, shape index: {}]
  %s6 = inlined_call_operand.hbm [shape: f32[16,32], index: 6, kind: output, shape index: {}]
  %s7 = sld [smem:[#allocation0]]
  $region77: #{tpu_custom_call.1} parent=0
    _
  %s9 = ssub.s32 1, %s7
  %s10 = scalar_select 0, %s9, %s7
  $region1: #{tpu_custom_call.1} parent=0
    #allocation2 [shape = 'u8[512]{0}', space=smem, size = 0x200, scoped, tag = 'input window, operand 0, single buffered']
    #allocation3 [shape = 's32[2]{0}', space=sflag, size = 0x8, scoped, tag = 'scoped memory for tpu_custom_call.1']
    #allocation4 [shape = 's32[2]{0}', space=sflag, size = 0x8, scoped, tag = 'scoped memory for tpu_custom_call.1']
    #allocation5 [shape = 's32[2]{0}', space=sflag, size = 0x8, scoped, tag = 'scoped memory for tpu_custom_call.1']
    #allocation6 [shape = 'u8[8192]{0}', space=vmem, size = 0x2000, scoped, tag = 'input window, operand 1']
    #allocation7 [shape = 'u8[8192]{0}', space=vmem, size = 0x2000, scoped, tag = 'input window, operand 2']
    #allocation8 [shape = 's32[2]{0}', space=sflag, size = 0x8, scoped, tag = 'scoped memory for tpu_custom_call.1']
    #allocation9 [shape = 'u8[8192]{0}', space=vmem, size = 0x2000, scoped, tag = 'input window, operand 3']
    #allocation10 [shape = 'u8[16384]{0}', space=vmem, size = 0x4000, scoped, tag = 'input window, operand 4, single buffered']
    #allocation11 [shape = 's32[1]{0}', space=sflag, size = 0x4, scoped, tag = 'scoped memory for tpu_custom_call.1']
    #allocation12 [shape = 'u8[8192]{0}', space=vmem, size = 0x2000, scoped, tag = 'output window, operand 0']
    %11 = vsyncpa [#allocation5], 0
    %12 = vsyncpa [#allocation3], 0
    %s13 = scalar_lea.sflag [#allocation3], 1
    %14 = vsyncpa %s13, 0
    %15 = vsyncpa [#allocation8], 0
    %s16 = scalar_lea.sflag [#allocation8], 1
    %17 = vsyncpa %s16, 0
    %18 = vsyncpa [#allocation11], 0
    %19 = vsyncpa [#allocation4], 0
    %s20 = scalar_lea.sflag [#allocation4], 1
    %21 = vsyncpa %s20, 0
    loop: start=0, step=1, limit=4
    $region2: #{tpu_custom_call.1} parent=1 // loop_pre_header
      _
    $region3: #{tpu_custom_call.1} parent=1 // loop_header
      %s23 = sphi 0, %s27
      %p24 = scmp.ge.s32.totalorder %s23, 4
      %s30 = sphi 0, %s42
      %s31 = sphi 0, %s38
      %s32 = sphi 0, %s30
      %s33 = sphi 0, %s31
      %s34 = sphi 0, %s32
      %s35 = sphi 0, %s33
      %s43 = sphi 0, %s43
      %s45 = sphi 0, %s43
      %s46 = sphi 0, %s45
      %s60 = sphi 0, %s46
      %s66 = sphi 0, %s68
      %s69 = sphi 0, %s66
      %s70 = sphi 0, %s69
      %s86 = sphi 0, %s70
      %s92 = sphi 0, %s94
      %s95 = sphi 0, %s92
      %s96 = sphi 0, %s95
      %s112 = sphi 0, %s96
      %s118 = sphi 0, %s120
      %s121 = sphi 0, %s118
      %s122 = sphi 0, %s121
      %s138 = sphi 0, %s122
      %s144 = sphi 0, %s146
      %s147 = sphi 0, %s144
      %s148 = sphi 0, %s147
      %s164 = sphi 0, %s148
      %s170 = sphi 0, %s172
      %s173 = sphi 0, %s170
      %s174 = sphi 0, %s173
      %s190 = sphi 0, %s174
      %s198 = sphi 0, %s200
      %s201 = sphi 0, %s198
      %s202 = sphi 0, %s201
      %s218 = sphi 0, %s202
    $region4: #{tpu_custom_call.1} parent=1 // loop_header_branch
      %26 = sbr.rel (%p24) target = $region8
    $region5: #{tpu_custom_call.1} parent=1 // loop_body
      %s28 = ssub.s32 %s23, 1
      %s29 = ssub.s32 %s23, 2
      %s36 = sadd.s32 1, %s31
      %p37 = scmp.ge.s32.totalorder %s36, 2
      %s38 = scalar_select %p37, 0, %s36
      %s39 = sadd.s32 1, %s30
      %s40 = scalar_select %p37, %s39, %s30
      %p41 = scmp.ge.s32.totalorder %s40, 1
      %s42 = scalar_select %p41, 0, %s40
      %s44 = sadd.s32 %s43, 1
      %p47 = scmp.eq.s32.totalorder %s23, 1
      %p48 = scmp.ne.s32.totalorder %s43, %s45
      %p49 = scmp.eq.s32.totalorder %s23, 0
      %p50 = por %p48, %p49
      %p51 = scmp.ne.s32.totalorder %s43, %s45
      %p52 = scmp.eq.s32.totalorder %s28, 1
      %p53 = por %p51, %p52
      %p54 = scmp.ne.s32.totalorder %s45, %s46
      %p55 = scmp.eq.s32.totalorder %s28, 0
      %p56 = por %p54, %p55
      %p57 = scmp.ne.s32.totalorder %s45, %s46
      %p58 = scmp.eq.s32.totalorder %s29, 1
      %p59 = por %p57, %p58
      %p61 = scmp.ne.s32.totalorder %s46, %s60
      %p62 = scmp.eq.s32.totalorder %s29, 0
      %p63 = por %p61, %p62
      %s64 = ssub.s32 %s31, %s38
      %p65 = scmp.eq.s32.totalorder %s64, 0
      %s67 = sadd.s32 %s66, 1
      %s68 = scalar_select %p65, %s66, %s67
      %p71 = pneg %p65
      %p72 = scmp.eq.s32.totalorder %s23, 1
      %p73 = por %p71, %p72
      %p74 = scmp.ne.s32.totalorder %s66, %s69
      %p75 = scmp.eq.s32.totalorder %s23, 0
      %p76 = por %p74, %p75
      %p77 = scmp.ne.s32.totalorder %s66, %s69
      %p78 = scmp.eq.s32.totalorder %s28, 1
      %p79 = por %p77, %p78
      %p80 = scmp.ne.s32.totalorder %s69, %s70
      %p81 = scmp.eq.s32.totalorder %s28, 0
      %p82 = por %p80, %p81
      %p83 = scmp.ne.s32.totalorder %s69, %s70
      %p84 = scmp.eq.s32.totalorder %s29, 1
      %p85 = por %p83, %p84
      %p87 = scmp.ne.s32.totalorder %s70, %s86
      %p88 = scmp.eq.s32.totalorder %s29, 0
      %p89 = por %p87, %p88
      %s90 = ssub.s32 %s31, %s38
      %p91 = scmp.eq.s32.totalorder %s90, 0
      %s93 = sadd.s32 %s92, 1
      %s94 = scalar_select %p91, %s92, %s93
      %p97 = pneg %p91
      %p98 = scmp.eq.s32.totalorder %s23, 1
      %p99 = por %p97, %p98
      %p100 = scmp.ne.s32.totalorder %s92, %s95
      %p101 = scmp.eq.s32.totalorder %s23, 0
      %p102 = por %p100, %p101
      %p103 = scmp.ne.s32.totalorder %s92, %s95
      %p104 = scmp.eq.s32.totalorder %s28, 1
      %p105 = por %p103, %p104
      %p106 = scmp.ne.s32.totalorder %s95, %s96
      %p107 = scmp.eq.s32.totalorder %s28, 0
      %p108 = por %p106, %p107
      %p109 = scmp.ne.s32.totalorder %s95, %s96
      %p110 = scmp.eq.s32.totalorder %s29, 1
      %p111 = por %p109, %p110
      %p113 = scmp.ne.s32.totalorder %s96, %s112
      %p114 = scmp.eq.s32.totalorder %s29, 0
      %p115 = por %p113, %p114
      %s116 = ssub.s32 %s31, %s38
      %p117 = scmp.eq.s32.totalorder %s116, 0
      %s119 = sadd.s32 %s118, 1
      %s120 = scalar_select %p117, %s118, %s119
      %p123 = pneg %p117
      %p124 = scmp.eq.s32.totalorder %s23, 1
      %p125 = por %p123, %p124
      %p126 = scmp.ne.s32.totalorder %s118, %s121
      %p127 = scmp.eq.s32.totalorder %s23, 0
      %p128 = por %p126, %p127
      %p129 = scmp.ne.s32.totalorder %s118, %s121
      %p130 = scmp.eq.s32.totalorder %s28, 1
      %p131 = por %p129, %p130
      %p132 = scmp.ne.s32.totalorder %s121, %s122
      %p133 = scmp.eq.s32.totalorder %s28, 0
      %p134 = por %p132, %p133
      %p135 = scmp.ne.s32.totalorder %s121, %s122
      %p136 = scmp.eq.s32.totalorder %s29, 1
      %p137 = por %p135, %p136
      %p139 = scmp.ne.s32.totalorder %s122, %s138
      %p140 = scmp.eq.s32.totalorder %s29, 0
      %p141 = por %p139, %p140
      %s142 = ssub.s32 %s30, %s42
      %p143 = scmp.eq.s32.totalorder %s142, 0
      %s145 = sadd.s32 %s144, 1
      %s146 = scalar_select %p143, %s144, %s145
      %p149 = pneg %p143
      %p150 = scmp.eq.s32.totalorder %s23, 1
      %p151 = por %p149, %p150
      %p152 = scmp.ne.s32.totalorder %s144, %s147
      %p153 = scmp.eq.s32.totalorder %s23, 0
      %p154 = por %p152, %p153
      %p155 = scmp.ne.s32.totalorder %s144, %s147
      %p156 = scmp.eq.s32.totalorder %s28, 1
      %p157 = por %p155, %p156
      %p158 = scmp.ne.s32.totalorder %s147, %s148
      %p159 = scmp.eq.s32.totalorder %s28, 0
      %p160 = por %p158, %p159
      %p161 = scmp.ne.s32.totalorder %s147, %s148
      %p162 = scmp.eq.s32.totalorder %s29, 1
      %p163 = por %p161, %p162
      %p165 = scmp.ne.s32.totalorder %s148, %s164
      %p166 = scmp.eq.s32.totalorder %s29, 0
      %p167 = por %p165, %p166
      %s168 = ssub.s32 %s30, %s42
      %p169 = scmp.eq.s32.totalorder %s168, 0
      %s171 = sadd.s32 %s170, 1
      %s172 = scalar_select %p169, %s170, %s171
      %p175 = pneg %p169
      %p176 = scmp.eq.s32.totalorder %s23, 1
      %p177 = por %p175, %p176
      %p178 = scmp.ne.s32.totalorder %s170, %s173
      %p179 = scmp.eq.s32.totalorder %s23, 0
      %p180 = por %p178, %p179
      %p181 = scmp.ne.s32.totalorder %s170, %s173
      %p182 = scmp.eq.s32.totalorder %s28, 1
      %p183 = por %p181, %p182
      %p184 = scmp.ne.s32.totalorder %s173, %s174
      %p185 = scmp.eq.s32.totalorder %s28, 0
      %p186 = por %p184, %p185
      %p187 = scmp.ne.s32.totalorder %s173, %s174
      %p188 = scmp.eq.s32.totalorder %s29, 1
      %p189 = por %p187, %p188
      %p191 = scmp.ne.s32.totalorder %s174, %s190
      %p192 = scmp.eq.s32.totalorder %s29, 0
      %p193 = por %p191, %p192
      %s194 = ssub.s32 %s31, %s38
      %s195 = ssub.s32 %s30, %s42
      %s196 = sor.u32 %s194, %s195
      %p197 = scmp.eq.s32.totalorder %s196, 0
      %s199 = sadd.s32 %s198, 1
      %s200 = scalar_select %p197, %s198, %s199
      %p203 = pneg %p197
      %p204 = scmp.eq.s32.totalorder %s23, 1
      %p205 = por %p203, %p204
      %p206 = scmp.ne.s32.totalorder %s198, %s201
      %p207 = scmp.eq.s32.totalorder %s23, 0
      %p208 = por %p206, %p207
      %p209 = scmp.ne.s32.totalorder %s198, %s201
      %p210 = scmp.eq.s32.totalorder %s28, 1
      %p211 = por %p209, %p210
      %p212 = scmp.ne.s32.totalorder %s201, %s202
      %p213 = scmp.eq.s32.totalorder %s28, 0
      %p214 = por %p212, %p213
      %p215 = scmp.ne.s32.totalorder %s201, %s202
      %p216 = scmp.eq.s32.totalorder %s29, 1
      %p217 = por %p215, %p216
      %p219 = scmp.ne.s32.totalorder %s202, %s218
      %p220 = scmp.eq.s32.totalorder %s29, 0
      %p221 = por %p219, %p220
      %p222 = scmp.le.s32.totalorder 1, %s23
      %p223 = scmp.lt.s32.totalorder %s23, 3
      %p224 = pnand %p222, %p223
      %p225 = pneg %p224
      // Predicated region
      $region9: #{tpu_custom_call.1} parent=5 // pred_check
        _
      $region10: #{tpu_custom_call.1} parent=5 // pred_check_branch
        %227 = sbr.rel (%p224) target = $region12
      $region11: #{tpu_custom_call.1} parent=5 // pred_region
        %s228 = ssub.s32 %s23, 1
        // Predicated region
        $region13: #{tpu_custom_call.1} parent=11 // pred_check
          %p229 = pneg %p56
        $region14: #{tpu_custom_call.1} parent=11 // pred_check_branch
          %231 = sbr.rel (%p229) target = $region16
        $region15: #{tpu_custom_call.1} parent=11 // pred_region
          %s233 = ssub.s32 16, 16
          %234 = vsyncadd [#allocation5], %s233
          %237 = dma.hbm_to_smem %s0, 16, [#allocation2], [#allocation5]
        $region16: #{tpu_custom_call.1} parent=11 // pred_fallthru
          _
        // Predicated region
        $region17: #{tpu_custom_call.1} parent=11 // pred_check
          %p238 = pneg %p160
        $region18: #{tpu_custom_call.1} parent=11 // pred_check_branch
          %240 = sbr.rel (%p238) target = $region20
        $region19: #{tpu_custom_call.1} parent=11 // pred_region
          %s242 = ssub.s32 512, 512
          %243 = vsyncadd [#allocation11], %s242
          %s244 = smul.addr %s32, 128
          %s245 = scalar_lea.hbm %s4, %s244
          %s246 = sshll.u32 [#allocation10], 4
          %s247 = int_to_ptr.vmem [resolvable:$true] %s246
          %252 = dma.hbm_to_vmem [thread:$0]  %s245, 512, %s247, [#allocation11], 128, 128, 8
        $region20: #{tpu_custom_call.1} parent=11 // pred_fallthru
          _
        // Predicated region
        $region21: #{tpu_custom_call.1} parent=11 // pred_check
          %p253 = pneg %p186
        $region22: #{tpu_custom_call.1} parent=11 // pred_check_branch
          %255 = sbr.rel (%p253) target = $region24
        $region23: #{tpu_custom_call.1} parent=11 // pred_region
          %p256 = scmp.lt.s32.totalorder %s32, 0
          %s257 = scalar_select %p256, %s32, 0
          %s258 = scalar_lea.vmem %s5, %s257
        $region24: #{tpu_custom_call.1} parent=11 // pred_fallthru
          _
      $region12: #{tpu_custom_call.1} parent=5 // pred_fallthru
        _
      %p259 = scmp.lt.s32.totalorder %s23, 2
      // Predicated region
      $region25: #{tpu_custom_call.1} parent=5 // pred_check
        %p260 = pneg %p259
      $region26: #{tpu_custom_call.1} parent=5 // pred_check_branch
        %262 = sbr.rel (%p260) target = $region28
      $region27: #{tpu_custom_call.1} parent=5 // pred_region
        // Predicated region
        $region29: #{tpu_custom_call.1} parent=27 // pred_check
          %p263 = pneg %p76
        $region30: #{tpu_custom_call.1} parent=27 // pred_check_branch
          %265 = sbr.rel (%p263) target = $region32
        $region31: #{tpu_custom_call.1} parent=27 // pred_region
          %s266 = sand.u32 %s66, 1
          %s267 = scalar_lea.sflag [#allocation3], %s266
          %s268 = sand.u32 %s66, 1
          %s269 = smul.addr %s268, 8
          %s270 = scalar_lea.vmem [#allocation6], %s269
          %s272 = ssub.s32 128, 128
          %273 = vsyncadd %s267, %s272
          %s274 = smul.addr %s31, 128
          %s275 = scalar_lea.hbm %s1, %s274
          %s277 = sshll.u32 %s270, 4
          %s278 = int_to_ptr.vmem [resolvable:$true] %s277
          %280 = dma.hbm_to_vmem [thread:$0]  %s275, 128, %s278, %s267
        $region32: #{tpu_custom_call.1} parent=27 // pred_fallthru
          _
        // Predicated region
        $region33: #{tpu_custom_call.1} parent=27 // pred_check
          %p281 = pneg %p102
        $region34: #{tpu_custom_call.1} parent=27 // pred_check_branch
          %283 = sbr.rel (%p281) target = $region36
        $region35: #{tpu_custom_call.1} parent=27 // pred_region
          %s284 = sand.u32 %s23, 1
          %s285 = scalar_lea.sflag [#allocation8], %s284
          %s286 = sand.u32 %s92, 1
          %s287 = smul.addr %s286, 8
          %s288 = scalar_lea.vmem [#allocation7], %s287
          %s290 = ssub.s32 128, 128
          %291 = vsyncadd %s285, %s290
          %s292 = smul.addr %s31, 128
          %s293 = scalar_lea.hbm %s2, %s292
          %s295 = sshll.u32 %s288, 4
          %s296 = int_to_ptr.vmem [resolvable:$true] %s295
          %298 = dma.hbm_to_vmem [thread:$0]  %s293, 128, %s296, %s285
        $region36: #{tpu_custom_call.1} parent=27 // pred_fallthru
          _
        // Predicated region
        $region37: #{tpu_custom_call.1} parent=27 // pred_check
          %p299 = pneg %p128
        $region38: #{tpu_custom_call.1} parent=27 // pred_check_branch
          %301 = sbr.rel (%p299) target = $region40
        $region39: #{tpu_custom_call.1} parent=27 // pred_region
          %s302 = sand.u32 %s23, 1
          %s303 = scalar_lea.sflag [#allocation8], %s302
          %s304 = sand.u32 %s118, 1
          %s305 = smul.addr %s304, 8
          %s306 = scalar_lea.vmem [#allocation9], %s305
          %s308 = ssub.s32 128, 128
          %309 = vsyncadd %s303, %s308
          %s310 = smul.addr %s31, 128
          %s311 = scalar_lea.hbm %s3, %s310
          %s313 = sshll.u32 %s306, 4
          %s314 = int_to_ptr.vmem [resolvable:$true] %s313
          %316 = dma.hbm_to_vmem [thread:$0]  %s311, 128, %s314, %s303
        $region40: #{tpu_custom_call.1} parent=27 // pred_fallthru
          _
      $region28: #{tpu_custom_call.1} parent=5 // pred_fallthru
        _
      %p317 = scmp.le.s32.totalorder 1, %s23
      %p318 = scmp.lt.s32.totalorder %s23, 3
      %p319 = pnand %p317, %p318
      %p320 = pneg %p319
      // Predicated region
      $region41: #{tpu_custom_call.1} parent=5 // pred_check
        _
      $region42: #{tpu_custom_call.1} parent=5 // pred_check_branch
        %322 = sbr.rel (%p319) target = $region44
      $region43: #{tpu_custom_call.1} parent=5 // pred_region
        %s323 = ssub.s32 %s23, 1
        // Predicated region
        $region45: #{tpu_custom_call.1} parent=43 // pred_check
          %p324 = pneg %p56
        $region46: #{tpu_custom_call.1} parent=43 // pred_check_branch
          %326 = sbr.rel (%p324) target = $region48
        $region47: #{tpu_custom_call.1} parent=43 // pred_region
          %327 = dma.done [#allocation5], 16
        $region48: #{tpu_custom_call.1} parent=43 // pred_fallthru
          _
        %s328 = sand.u32 %s69, 1
        %s329 = scalar_lea.sflag [#allocation3], %s328
        %s330 = sand.u32 %s69, 1
        %s331 = smul.addr %s330, 8
        %s332 = scalar_lea.vmem [#allocation6], %s331
        // Predicated region
        $region49: #{tpu_custom_call.1} parent=43 // pred_check
          %p333 = pneg %p82
        $region50: #{tpu_custom_call.1} parent=43 // pred_check_branch
          %335 = sbr.rel (%p333) target = $region52
        $region51: #{tpu_custom_call.1} parent=43 // pred_region
          %336 = dma.done %s329, 128
        $region52: #{tpu_custom_call.1} parent=43 // pred_fallthru
          _
        %s337 = sand.u32 %s28, 1
        %s338 = scalar_lea.sflag [#allocation8], %s337
        %s339 = sand.u32 %s95, 1
        %s340 = smul.addr %s339, 8
        %s341 = scalar_lea.vmem [#allocation7], %s340
        // Predicated region
        $region53: #{tpu_custom_call.1} parent=43 // pred_check
          %p342 = pneg %p108
        $region54: #{tpu_custom_call.1} parent=43 // pred_check_branch
          %344 = sbr.rel (%p342) target = $region56
        $region55: #{tpu_custom_call.1} parent=43 // pred_region
          %345 = dma.done %s338, 128
        $region56: #{tpu_custom_call.1} parent=43 // pred_fallthru
          _
        %s346 = sand.u32 %s28, 1
        %s347 = scalar_lea.sflag [#allocation8], %s346
        %s348 = sand.u32 %s121, 1
        %s349 = smul.addr %s348, 8
        %s350 = scalar_lea.vmem [#allocation9], %s349
        // Predicated region
        $region57: #{tpu_custom_call.1} parent=43 // pred_check
          %p351 = pneg %p134
        $region58: #{tpu_custom_call.1} parent=43 // pred_check_branch
          %353 = sbr.rel (%p351) target = $region60
        $region59: #{tpu_custom_call.1} parent=43 // pred_region
          %354 = dma.done %s347, 128
        $region60: #{tpu_custom_call.1} parent=43 // pred_fallthru
          _
        // Predicated region
        $region61: #{tpu_custom_call.1} parent=43 // pred_check
          %p355 = pneg %p160
        $region62: #{tpu_custom_call.1} parent=43 // pred_check_branch
          %357 = sbr.rel (%p355) target = $region64
        $region63: #{tpu_custom_call.1} parent=43 // pred_region
          %358 = dma.done [#allocation11], 512
        $region64: #{tpu_custom_call.1} parent=43 // pred_fallthru
          _
        %359 = sfence
        %p360 = pneg %p56
        %p361 = pneg %p53
        %s362 = sand.u32 %s69, 1
        %s363 = scalar_lea.sflag [#allocation3], %s362
        %s364 = sand.u32 %s69, 1
        %s365 = smul.addr %s364, 8
        %s366 = scalar_lea.vmem [#allocation6], %s365
        %p367 = pneg %p82
        %p368 = pneg %p79
        %s369 = sand.u32 %s28, 1
        %s370 = scalar_lea.sflag [#allocation8], %s369
        %s371 = sand.u32 %s95, 1
        %s372 = smul.addr %s371, 8
        %s373 = scalar_lea.vmem [#allocation7], %s372
        %p374 = pneg %p108
        %p375 = pneg %p105
        %s376 = sand.u32 %s28, 1
        %s377 = scalar_lea.sflag [#allocation8], %s376
        %s378 = sand.u32 %s121, 1
        %s379 = smul.addr %s378, 8
        %s380 = scalar_lea.vmem [#allocation9], %s379
        %p381 = pneg %p134
        %p382 = pneg %p131
        %p383 = pneg %p160
        %p384 = pneg %p157
        %p385 = scmp.lt.s32.totalorder %s32, 0
        %s386 = scalar_select %p385, %s32, 0
        %s387 = scalar_lea.vmem %s5, %s386
        %p388 = pneg %p186
        %p389 = pneg %p183
        %p390 = pneg %p214
        %p391 = pneg %p211
        %s392 = sand.u32 %s201, 1
        %s393 = scalar_lea.sflag [#allocation4], %s392
        %s394 = sand.u32 %s201, 1
        %s395 = smul.addr %s394, 8
        %s396 = scalar_lea.vmem [#allocation12], %s395
        %p397 = scmp.lt.s32.totalorder %s32, 0
        %s398 = scalar_select %p397, %s32, 0
        %s399 = scalar_lea.vmem %s5, %s398
        %s400 = sld [smem:[#allocation2]]
        %s401 = sld [smem:[#allocation2 + $0x1]]
        %s402 = sld [smem:[#allocation2 + $0x2]]
        %v403 = vld [vmem:[%s332] sm:$0xff]
        %v404 = vstv %s400
        %v405 = vmul.f32 %v404, %v403
        %v406 = vld [vmem:[%s341] sm:$0xff]
        %v407 = vstv %s401
        %v408 = vmul.f32 %v407, %v406
        %v409 = vadd.f32 %v405, %v408
        %v410 = vld [vmem:[%s350] sm:$0xff]
        %v411 = vstv %s402
        %v412 = vmul.f32 %v411, %v410
        %v413 = vadd.f32 %v409, %v412
        %v414 = vld [vmem:[#allocation10] sm:$0xff]
        %v415 = vld [vmem:[#allocation10 + $0x8] sm:$0xff]
        %v416 = vld [vmem:[#allocation10 + $0x10] sm:$0xff]
        %v417 = vld [vmem:[#allocation10 + $0x18] sm:$0xff]
        %v418 = vld [vmem:[%s399] sm:$0x1]
        %v420 = vlaneseq
        %v421 = vshrl.u32 %v420, 7
        %v422 = vsub.s32 0, %v421
        %v423 = vrot.slane %v418, %v422
        %vm425 = vcmask 261120
        %v427 = vsel %vm425, %v413, 0
        %429 = vmatprep.subr.mxu0 0.0
        %430 = vmatpush1.msra.mxu0 0.0
        %431 = vmatprep.subr.mxu0 0.0
        %432 = vmatpush1.msra.mxu0 0.0
        %433 = vmatprep.subr.mxu0 0.0
        %434 = vmatpush1.msra.mxu0 0.0
        %435 = vmatprep.subr.mxu0 0.0
        %436 = vmatpush1.msra.mxu0 0.0
        %437 = vmatprep.subr.mxu0 0.0
        %438 = vmatpush1.msra.mxu0 0.0
        %439 = vmatprep.subr.mxu0 0.0
        %440 = vmatpush1.msra.mxu0 0.0
        %441 = vmatprep.subr.mxu0 0.0
        %442 = vmatpush1.msra.mxu0 0.0
        %443 = vmatprep.subr.mxu0 0.0
        %444 = vmatpush1.msra.mxu0 0.0
        %445 = vmatprep.subr.mxu0 0.0
        %446 = vmatpush1.msra.mxu0 0.0
        %447 = vmatprep.subr.mxu0 0.0
        %448 = vmatpush1.msra.mxu0 0.0
        %449 = vmatprep.subr.mxu0 0.0
        %450 = vmatpush1.msra.mxu0 0.0
        %451 = vmatprep.subr.mxu0 0.0
        %452 = vmatpush1.msra.mxu0 0.0
        %453 = vmatprep.subr.mxu0 0.0
        %454 = vmatpush1.msra.mxu0 %v417
        %455 = vmatprep.subr.mxu0 0.0
        %456 = vmatpush1.msra.mxu0 %v416
        %457 = vmatprep.subr.mxu0 0.0
        %458 = vmatpush1.msra.mxu0 %v415
        %459 = vmatprep.subr.mxu0 0.0
        %460 = vmatpush1.msra.mxu0 %v414
        %461 = vmatprep.subr.mxu0 0.0
        %462 = vmatpush2.msra.mxu0 0.0
        %463 = vmatprep.subr.mxu0 0.0
        %464 = vmatpush2.msra.mxu0 0.0
        %465 = vmatprep.subr.mxu0 0.0
        %466 = vmatpush2.msra.mxu0 0.0
        %467 = vmatprep.subr.mxu0 0.0
        %468 = vmatpush2.msra.mxu0 0.0
        %469 = vmatprep.subr.mxu0 0.0
        %470 = vmatpush2.msra.mxu0 0.0
        %471 = vmatprep.subr.mxu0 0.0
        %472 = vmatpush2.msra.mxu0 0.0
        %473 = vmatprep.subr.mxu0 0.0
        %474 = vmatpush2.msra.mxu0 0.0
        %475 = vmatprep.subr.mxu0 0.0
        %476 = vmatpush2.msra.mxu0 0.0
        %477 = vmatprep.subr.mxu0 0.0
        %478 = vmatpush2.msra.mxu0 0.0
        %479 = vmatprep.subr.mxu0 0.0
        %480 = vmatpush2.msra.mxu0 0.0
        %481 = vmatprep.subr.mxu0 0.0
        %482 = vmatpush2.msra.mxu0 0.0
        %483 = vmatprep.subr.mxu0 0.0
        %484 = vmatpush2.msra.mxu0 0.0
        %485 = vmatprep.subr.mxu0 0.0
        %486 = vmatpush2.msra.mxu0 0.0
        %487 = vmatprep.subr.mxu0 0.0
        %488 = vmatpush2.msra.mxu0 0.0
        %489 = vmatprep.subr.mxu0 0.0
        %490 = vmatpush2.msra.mxu0 0.0
        %491 = vmatprep.subr.mxu0 0.0
        %492 = vmatpush2.msra.mxu0 0.0
        %493 = vmatprep.mubr.f32.mxu0 0.0
        %494 = vmatmul.mubr.f32.gmra.mxu0 %v427
        %v495 = vpop.f32.mrf.mxu0
        %v496 = vadd.f32 %v423, %v495
        %v497 = vpop.f32.mrf.mxu0
        %498 = vdwg.mxu0
        %499 = vst.msk [vmem:[%s396] sm:$0xff] %vm425, %v496
        %s500 = sand.u32 %s201, 1
        %s501 = scalar_lea.sflag [#allocation4], %s500
        %s502 = sand.u32 %s201, 1
        %s503 = smul.addr %s502, 8
        %s504 = scalar_lea.vmem [#allocation12], %s503
        // Predicated region
        $region65: #{tpu_custom_call.1} parent=43 // pred_check
          %p505 = pneg %p211
        $region66: #{tpu_custom_call.1} parent=43 // pred_check_branch
          %507 = sbr.rel (%p505) target = $region68
        $region67: #{tpu_custom_call.1} parent=43 // pred_region
          %s509 = ssub.s32 128, 128
          %510 = vsyncadd %s501, %s509
          %s511 = sadd.s32 %s32, %s33
          %s512 = smul.addr %s511, 128
          %s513 = scalar_lea.hbm %s6, %s512
          %s515 = sshll.u32 %s504, 4
          %s516 = int_to_ptr.vmem [resolvable:$true] %s515
          %518 = dma.vmem_to_hbm [thread:$0]  %s516, 128, %s513, %s501
        $region68: #{tpu_custom_call.1} parent=43 // pred_fallthru
          _
      $region44: #{tpu_custom_call.1} parent=5 // pred_fallthru
        _
      %p519 = scmp.le.s32.totalorder 2, %s23
      // Predicated region
      $region69: #{tpu_custom_call.1} parent=5 // pred_check
        %p520 = pneg %p519
      $region70: #{tpu_custom_call.1} parent=5 // pred_check_branch
        %522 = sbr.rel (%p520) target = $region72
      $region71: #{tpu_custom_call.1} parent=5 // pred_region
        %s523 = ssub.s32 %s23, 2
        // Predicated region
        $region73: #{tpu_custom_call.1} parent=71 // pred_check
          %p524 = pneg %p217
        $region74: #{tpu_custom_call.1} parent=71 // pred_check_branch
          %526 = sbr.rel (%p524) target = $region76
        $region75: #{tpu_custom_call.1} parent=71 // pred_region
          %s527 = sand.u32 %s202, 1
          %s528 = scalar_lea.sflag [#allocation4], %s527
          %s529 = sand.u32 %s202, 1
          %s530 = smul.addr %s529, 8
          %s531 = scalar_lea.vmem [#allocation12], %s530
          %532 = dma.done %s528, 128
        $region76: #{tpu_custom_call.1} parent=71 // pred_fallthru
          _
      $region72: #{tpu_custom_call.1} parent=5 // pred_fallthru
        _
    $region6: #{tpu_custom_call.1} parent=1 // loop_footer
      %s27 = sadd.s32 1, %s23
    $region7: #{tpu_custom_call.1} parent=1 // loop_footer_branch
      %22 = sbr.rel target = $region3
    $region8: #{tpu_custom_call.1} parent=1 // loop_exit
      _
    %533 = vsyncpa [#allocation3], 1
    %s534 = scalar_lea.sflag [#allocation3], 1
    %535 = vsyncpa %s534, 1
    %536 = vsyncpa [#allocation8], 1
    %s537 = scalar_lea.sflag [#allocation8], 1
    %538 = vsyncpa %s537, 1
    %539 = vsyncpa [#allocation11], 1
    %540 = vsyncpa [#allocation4], 1
    %s541 = scalar_lea.sflag [#allocation4], 1
    %542 = vsyncpa %s541, 1
    %543 = vsyncpa [#allocation5], 1
    %s544 = scalar_lea.sflag [#allocation5], 1
    %545 = vsyncpa %s544, 1

</llo_original>
